<compile_context>
chip_gen: v5e
topology: v5e:2x2
jax: 0.10.0
libtpu: 0.0.40
codegen_flags: <defaults>
</compile_context>

<pallas_src>
import jax
import jax.numpy as jnp
from jax import lax
from jax.experimental import pallas as pl
from jax.experimental.pallas import tpu as pltpu


def _round_up(v, m):
    return ((v + m - 1) // m) * m


def _choose_tiles(n):
    """Return (tile_dst, tile_src, tile_proj, n_pad).

    Constraints honored:
      * the last dim of every block is a multiple of 128 or the full extent,
      * second-to-last block dims are the full extent or multiples of 32
        (safe for int8 / bf16 sublane packing),
      * every tile divides n_pad.
    """
    n8 = _round_up(max(n, 8), 8)
    if n8 <= 128:
        n_pad = n8
        tile_src = n_pad            # full src extent (single reduction step)
        tile_proj = n_pad
        half = n_pad // 2
        # >= 2 steps on the 'parallel' dst axis (megacore) when safely possible.
        tile_dst = half if (n_pad >= 64 and half % 32 == 0) else n_pad
    elif n8 <= 1024:
        tile_src = 128
        tile_dst = 128
        tile_proj = 128
        n_pad = _round_up(n, 128)
    else:
        tile_src = 512
        tile_dst = 256
        tile_proj = 512
        n_pad = _round_up(n, 512)
    return tile_dst, tile_src, tile_proj, n_pad


# Generation-aware scoped-VMEM limit (~96 MiB on 128 MiB parts, ~48 MiB on v7x).
_VMEM_LIMIT_CACHE = [None]


def _vmem_limit_bytes():
    if _VMEM_LIMIT_CACHE[0] is None:
        cap = 64 * 1024 * 1024
        try:
            info = pltpu.get_tpu_info()
            cap = int(getattr(info, "vmem_capacity_bytes", cap))
        except Exception:
            pass
        _VMEM_LIMIT_CACHE[0] = int(min(cap * 3 // 4, 100 * 1024 * 1024))
    return _VMEM_LIMIT_CACHE[0]


# ---------------------------------------------------------------------------
# Kernel 1: projection + attention-score kernel (row-tiled over nodes).
# ---------------------------------------------------------------------------
def _make_proj_kernel(H, D, emit_res):
    HD = H * D

    def kernel(x_ref, wcat_ref, attnl_ref, attnr_ref, *out_refs):
        if emit_res:
            feat_ref, elt_ref, er_ref, res_ref = out_refs
        else:
            feat_ref, elt_ref, er_ref = out_refs
        xb = x_ref[...].astype(jnp.bfloat16)
        # Fused feature + residual projection: one bf16 MXU matmul, f32 accumulate.
        proj = jnp.dot(xb, wcat_ref[...], preferred_element_type=jnp.float32)
        featb = proj[:, :HD].astype(jnp.bfloat16)
        feat_ref[...] = featb
        # Per-head attention scores via MXU (block-diagonal attention matrices);
        # el comes out already transposed (src-major lanes).
        er_ref[...] = jnp.dot(featb, attnr_ref[...],
                              preferred_element_type=jnp.float32)        # (tile, H)
        elt_ref[...] = lax.dot_general(                                   # (H, tile)
            attnl_ref[...], featb,
            dimension_numbers=(((1,), (1,)), ((), ())),
            preferred_element_type=jnp.float32)
        if emit_res:
            # Non-identity residual stored in bf16 (halves HBM write + read).
            res_ref[...] = proj[:, HD:].astype(jnp.bfloat16)

    return kernel


def gat_project(x_pad, prepped, *, tile, n_pad):
    H, D = prepped["H"], prepped["D"]
    HD = H * D
    f_in = x_pad.shape[1]
    wcat = prepped["wcat"]
    wcols = wcat.shape[1]
    emit_res = prepped["res_mode"] == "proj"

    out_shape = [
        jax.ShapeDtypeStruct((n_pad, HD), jnp.bfloat16),   # feat (bf16 MXU feed)
        jax.ShapeDtypeStruct((H, n_pad), jnp.float32),     # el^T  (src scores)
        jax.ShapeDtypeStruct((n_pad, H), jnp.float32),     # er    (dst scores)
    ]
    out_specs = [
        pl.BlockSpec((tile, HD), lambda i: (i, 0)),
        pl.BlockSpec((H, tile), lambda i: (0, i)),
        pl.BlockSpec((tile, H), lambda i: (i, 0)),
    ]
    if emit_res:
        out_shape.append(jax.ShapeDtypeStruct((n_pad, HD), jnp.bfloat16))
        out_specs.append(pl.BlockSpec((tile, HD), lambda i: (i, 0)))

    cost = pl.CostEstimate(
        flops=int(2 * n_pad * f_in * wcols + 4 * n_pad * HD * H),
        transcendentals=0,
        bytes_accessed=int(n_pad * f_in * 4 + f_in * wcols * 2
                           + n_pad * (HD * 2 + 2 * H * 4)
                           + (n_pad * HD * 2 if emit_res else 0)))

    outs = pl.pallas_call(
        _make_proj_kernel(H, D, emit_res),
        out_shape=tuple(out_shape),
        grid=(n_pad // tile,),
        in_specs=[
            pl.BlockSpec((tile, f_in), lambda i: (i, 0)),          # x row tile
            pl.BlockSpec((f_in, wcols), lambda i: (0, 0)),         # [W | res_W] (bf16)
            pl.BlockSpec((H, HD), lambda i: (0, 0)),               # attn_l (block-diag, T)
            pl.BlockSpec((HD, H), lambda i: (0, 0)),               # attn_r (block-diag)
        ],
        out_specs=tuple(out_specs),
        compiler_params=pltpu.CompilerParams(
            dimension_semantics=("parallel",),
            vmem_limit_bytes=_vmem_limit_bytes()),
        cost_estimate=cost,
    )(x_pad, wcat, prepped["attn_l_mat"], prepped["attn_r_blk"])

    if emit_res:
        feat, elt, er, res = outs
    else:
        (feat, elt, er), res = outs, None
    return feat, elt, er, res


# ---------------------------------------------------------------------------
# Kernel 2: masked online edge-softmax + aggregation on a 2-D (dst, src) grid.
# ---------------------------------------------------------------------------
def _make_attn_kernel(H, D, slope, apply_elu, fuse_mean_logsoftmax, has_res):
    HD = H * D
    NEG = -1e30

    def kernel(*refs):
        if has_res:
            (adj_ref, feat_ref, elt_ref, er_ref, bias_ref, res_ref,
             o_ref, m_sc, l_sc, acc_sc) = refs
        else:
            (adj_ref, feat_ref, elt_ref, er_ref, bias_ref,
             o_ref, m_sc, l_sc, acc_sc) = refs
            res_ref = None

        j = pl.program_id(1)

        @pl.when(j == 0)
        def _():
            m_sc[...] = jnp.full(m_sc.shape, NEG, jnp.float32)
            l_sc[...] = jnp.zeros(l_sc.shape, jnp.float32)
            acc_sc[...] = jnp.zeros(acc_sc.shape, jnp.float32)

        mask = adj_ref[...] != 0                      # (td, ts) int8 adjacency block
        feat = feat_ref[...]                          # (ts, HD) bf16 src features
        elt = elt_ref[...]                            # (H, ts)  src scores
        er = er_ref[...]                              # (td, H)  dst scores

        for h in range(H):                            # H small & static -> unrolled
            e = er[:, h:h + 1] + elt[h:h + 1, :]      # (td, ts), e[dst, src]
            e = jnp.where(e > 0, e, slope * e)        # LeakyReLU (f32)
            e = jnp.where(mask, e, NEG)               # mask non-edges
            m_old = m_sc[:, h:h + 1]
            m_new = jnp.maximum(m_old, jnp.max(e, axis=1, keepdims=True))
            # Keep the masked zeroing: with tiled src a dst row may be fully
            # masked in a block, in which case m_new is still NEG.
            p = jnp.where(mask, jnp.exp(e - m_new), 0.0)
            corr = jnp.exp(m_old - m_new)             # online-softmax rescale
            l_sc[:, h:h + 1] = (corr * l_sc[:, h:h + 1]
                                + jnp.sum(p, axis=1, keepdims=True))
            acc_sc[:, h * D:(h + 1) * D] = (
                corr * acc_sc[:, h * D:(h + 1) * D]
                + jnp.dot(p.astype(jnp.bfloat16), feat[:, h * D:(h + 1) * D],
                          preferred_element_type=jnp.float32))
            m_sc[:, h:h + 1] = m_new

        @pl.when(j == pl.num_programs(1) - 1)
        def _():
            bias = bias_ref[...]                                   # (1, HD)
            # Guarded denominator (isolated/padded rows) + EUP reciprocal.
            inv = pl.reciprocal(jnp.maximum(l_sc[...], 1e-20), approx=True)  # (td, H)
            res = res_ref[...].astype(jnp.float32) if has_res else None
            if fuse_mean_logsoftmax:
                acc = None
                for h in range(H):
                    t = (acc_sc[:, h * D:(h + 1) * D] * inv[:, h:h + 1]
                         + bias[:, h * D:(h + 1) * D])
                    if res is not None:
                        t = t + res[:, h * D:(h + 1) * D]
                    acc = t if acc is None else acc + t
                logits = acc * (1.0 / H)                           # head mean
                z = logits - jnp.max(logits, axis=1, keepdims=True)
                lse = jnp.log(jnp.sum(jnp.exp(z), axis=1, keepdims=True))
                o_ref[...] = z - lse                               # fused log_softmax
            else:
                for h in range(H):
                    acc_sc[:, h * D:(h + 1) * D] = (
                        acc_sc[:, h * D:(h + 1) * D] * inv[:, h:h + 1])
                out = acc_sc[...] + bias
                if res is not None:
                    out = out + res
                if apply_elu:
                    out = jnp.where(out > 0, out, jnp.expm1(out))  # ELU
                o_ref[...] = out                                   # one lane-dense store

    return kernel


def gat_aggregate(adj_pad, feat, elt, er, res, prepped, *, apply_elu,
                  fuse_mean_logsoftmax, tile_dst, tile_src, n_pad):
    H, D = prepped["H"], prepped["D"]
    HD = H * D
    has_res = res is not None
    out_cols = D if fuse_mean_logsoftmax else HD

    in_specs = [
        pl.BlockSpec((tile_dst, tile_src), lambda i, j: (i, j)),   # adj block stream
        pl.BlockSpec((tile_src, HD), lambda i, j: (j, 0)),         # feat (src rows)
        pl.BlockSpec((H, tile_src), lambda i, j: (0, j)),          # el^T (src cols)
        pl.BlockSpec((tile_dst, H), lambda i, j: (i, 0)),          # er   (dst rows)
        pl.BlockSpec((1, HD), lambda i, j: (0, 0)),                # bias
    ]
    args = [adj_pad, feat, elt, er, prepped["bias"]]
    if has_res:
        in_specs.append(pl.BlockSpec((tile_dst, HD), lambda i, j: (i, 0)))
        args.append(res)

    n_dst = n_pad // tile_dst
    n_src = n_pad // tile_src
    cost = pl.CostEstimate(
        flops=int(2 * H * D * n_pad * n_pad + 10 * H * n_pad * n_pad),
        transcendentals=int(H * n_pad * n_pad),
        bytes_accessed=int(n_pad * n_pad                           # int8 adj stream
                           + n_dst * n_pad * (HD * 2 + H * 4)      # feat + el^T per dst tile
                           + n_pad * out_cols * 4))

    return pl.pallas_call(
        _make_attn_kernel(H, D, prepped["slope"], apply_elu,
                          fuse_mean_logsoftmax, has_res),
        out_shape=jax.ShapeDtypeStruct((n_pad, out_cols), jnp.float32),
        grid=(n_dst, n_src),
        in_specs=in_specs,
        out_specs=pl.BlockSpec((tile_dst, out_cols), lambda i, j: (i, 0)),
        scratch_shapes=[
            pltpu.VMEM((tile_dst, H), jnp.float32),    # running max
            pltpu.VMEM((tile_dst, H), jnp.float32),    # running denominator
            pltpu.VMEM((tile_dst, HD), jnp.float32),   # running accumulator
        ],
        compiler_params=pltpu.CompilerParams(
            dimension_semantics=("parallel", "arbitrary"),
            vmem_limit_bytes=_vmem_limit_bytes()),
        cost_estimate=cost,
    )(*args)


def gat_conv_layer(x_pad, adj_pad, prepped, *, apply_elu, fuse_mean_logsoftmax,
                   tile_dst, tile_src, tile_proj, n_pad):
    feat, elt, er, res = gat_project(x_pad, prepped, tile=tile_proj, n_pad=n_pad)
    if prepped["res_mode"] == "identity":
        # DGL Identity residual: no matmul, no extra HBM tensor, exact f32 add.
        res = x_pad
    return gat_aggregate(adj_pad, feat, elt, er, res, prepped,
                         apply_elu=apply_elu,
                         fuse_mean_logsoftmax=fuse_mean_logsoftmax,
                         tile_dst=tile_dst, tile_src=tile_src, n_pad=n_pad)


# ---------------------------------------------------------------------------
# Full GAT forward (hidden GATConvs with ELU + output GATConv with fused
# head-mean + log_softmax).
# ---------------------------------------------------------------------------
def gat_forward(params, x, adj):
    N = x.shape[0]
    tile_dst, tile_src, tile_proj, n_pad = _choose_tiles(N)
    x_pad = jnp.pad(x, ((0, n_pad - N), (0, 0)))
    adj_pad = jnp.pad((adj > 0).astype(jnp.int8),       # int8 mask: 4x less HBM traffic
                      ((0, n_pad - N), (0, n_pad - N)))
    h = x_pad
    for prepped in params["hidden"]:
        h = gat_conv_layer(h, adj_pad, prepped, apply_elu=True,
                           fuse_mean_logsoftmax=False,
                           tile_dst=tile_dst, tile_src=tile_src,
                           tile_proj=tile_proj, n_pad=n_pad)
    logp = gat_conv_layer(h, adj_pad, params["out"], apply_elu=False,
                          fuse_mean_logsoftmax=True,
                          tile_dst=tile_dst, tile_src=tile_src,
                          tile_proj=tile_proj, n_pad=n_pad)
    return logp[:N], h[:N]


# ---------------------------------------------------------------------------
# Host-side parameter prep (fused weights, block-diagonal attention matrices).
# ---------------------------------------------------------------------------
def _block_diag_cols(attn):
    """(H, D) head vectors -> (H*D, H) block-diagonal matrix."""
    H, D = attn.shape
    eye = jnp.eye(H, dtype=attn.dtype)
    return (attn[:, :, None] * eye[:, None, :]).reshape(H * D, H)


def _prep_layer(layer):
    H, D = layer["H"], layer["D"]
    HD = H * D
    w = layer["w"]
    in_dim = w.shape[0]
    if not layer["residual"]:
        res_mode = "none"
    elif in_dim == HD:
        res_mode = "identity"       # DGL res_fc = Identity
    else:
        res_mode = "proj"           # DGL res_fc = Linear(in_dim, H*D)
    wcat = jnp.concatenate([w, layer["res_w"]], axis=1) if res_mode == "proj" else w
    return {
        "H": H, "D": D, "slope": layer["slope"], "res_mode": res_mode,
        "wcat": wcat.astype(jnp.bfloat16),                                      # (F_in, HD or 2HD)
        "attn_r_blk": _block_diag_cols(layer["attn_r"]).astype(jnp.bfloat16),   # (HD, H)
        "attn_l_mat": _block_diag_cols(layer["attn_l"]).T.astype(jnp.bfloat16),  # (H, HD)
        "bias": layer["bias"],                                                  # (1, HD)
    }


# ---------------------------------------------------------------------------
# Pure-JAX reference (same math, same bf16 MXU feeds) for a correctness check.
# ---------------------------------------------------------------------------
def _ref_gat_conv(x, prepped, mask, *, apply_elu, fuse_mean_logsoftmax):
    H, D, slope = prepped["H"], prepped["D"], prepped["slope"]
    HD = H * D
    proj = jnp.dot(x.astype(jnp.bfloat16), prepped["wcat"],
                   preferred_element_type=jnp.float32)
    featb = proj[:, :HD].astype(jnp.bfloat16)
    er = jnp.dot(featb, prepped["attn_r_blk"], preferred_element_type=jnp.float32)
    el = jnp.dot(featb, prepped["attn_l_mat"].T, preferred_element_type=jnp.float32)
    if prepped["res_mode"] == "proj":
        res = proj[:, HD:].astype(jnp.bfloat16).astype(jnp.float32)
    elif prepped["res_mode"] == "identity":
        res = x
    else:
        res = None
    acc = None
    outs = []
    for h in range(H):
        e = er[:, h:h + 1] + el[:, h:h + 1].T
        e = jnp.where(e > 0, e, slope * e)
        e = jnp.where(mask, e, -1e30)
        m = jnp.max(e, axis=1, keepdims=True)
        p = jnp.where(mask, jnp.exp(e - m), 0.0)
        denom = jnp.maximum(jnp.sum(p, axis=1, keepdims=True), 1e-20)
        num = jnp.dot(p.astype(jnp.bfloat16), featb[:, h * D:(h + 1) * D],
                      preferred_element_type=jnp.float32)
        out_h = num / denom + prepped["bias"][:, h * D:(h + 1) * D]
        if res is not None:
            out_h = out_h + res[:, h * D:(h + 1) * D]
        if fuse_mean_logsoftmax:
            acc = out_h if acc is None else acc + out_h
        else:
            if apply_elu:
                out_h = jnp.where(out_h > 0, out_h, jnp.expm1(out_h))
            outs.append(out_h)
    if fuse_mean_logsoftmax:
        return jax.nn.log_softmax(acc / H, axis=1)
    return jnp.concatenate(outs, axis=1)


def _ref_forward(params, x, adj):
    mask = adj > 0
    h = x
    for prepped in params["hidden"]:
        h = _ref_gat_conv(h, prepped, mask, apply_elu=True, fuse_mean_logsoftmax=False)
    logp = _ref_gat_conv(h, params["out"], mask, apply_elu=False,
                         fuse_mean_logsoftmax=True)
    return logp, h


# ---------------------------------------------------------------------------
# Deterministic parameter construction.
# ---------------------------------------------------------------------------
def _make_layer(key, in_dim, out_feats, num_heads, residual, slope):
    ks = jax.random.split(key, 5)
    scale = 1.0 / jnp.sqrt(jnp.float32(in_dim))
    layer = {
        "w": jax.random.normal(ks[0], (in_dim, num_heads * out_feats), jnp.float32) * scale,
        "attn_l": jax.random.normal(ks[1], (num_heads, out_feats), jnp.float32) * 0.1,
        "attn_r": jax.random.normal(ks[2], (num_heads, out_feats), jnp.float32) * 0.1,
        "bias": jax.random.normal(ks[3], (1, num_heads * out_feats), jnp.float32) * 0.01,
        "H": num_heads, "D": out_feats, "slope": slope, "residual": residual,
    }
    if residual and in_dim != num_heads * out_feats:
        layer["res_w"] = (jax.random.normal(ks[4], (in_dim, num_heads * out_feats),
                                            jnp.float32) * scale)
    # residual and in_dim == H*D -> DGL Identity residual: handled without res_w.
    return layer


if __name__ == "__main__":
    # Config: num_layers=2, in_dim=8, num_hidden=16, heads=[2,2,2], classes=4.
    IN_DIM, HIDDEN, CLASSES = 8, 16, 4
    HEADS = [2, 2, 2]
    SLOPE = 0.2
    NUM_LAYERS = 2
    RESIDUAL = True

    key = jax.random.PRNGKey(0)
    k_x1, k_a1, k_x2, k_a2, k_l0, k_l1, k_out = jax.random.split(key, 7)

    raw_hidden = [
        _make_layer(k_l0, IN_DIM, HIDDEN, HEADS[0], residual=False, slope=SLOPE),
        # in_dim == H*D here -> exercises the exact Identity-residual path.
        _make_layer(k_l1, HIDDEN * HEADS[0], HIDDEN, HEADS[1], residual=RESIDUAL,
                    slope=SLOPE),
    ]
    raw_out = _make_layer(k_out, HIDDEN * HEADS[1], CLASSES, HEADS[-1],
                          residual=RESIDUAL, slope=SLOPE)
    assert NUM_LAYERS == len(raw_hidden)
    params = {
        "hidden": [_prep_layer(l) for l in raw_hidden],
        "out": _prep_layer(raw_out),
    }

    def run_case(kx, ka, n_nodes, edge_p):
        x = jax.random.normal(kx, (n_nodes, IN_DIM), jnp.float32)
        adj = (jax.random.uniform(ka, (n_nodes, n_nodes)) < edge_p).astype(jnp.float32)
        adj = jnp.clip(adj + jnp.eye(n_nodes, dtype=jnp.float32), 0.0, 1.0)  # self-loops
        logp, h = gat_forward(params, x, adj)
        logp = jax.block_until_ready(logp)
        h = jax.block_until_ready(h)
        ref_logp, ref_h = _ref_forward(params, x, adj)
        assert logp.shape == (n_nodes, CLASSES)
        assert h.shape == (n_nodes, HEADS[1] * HIDDEN)
        assert bool(jnp.all(jnp.isfinite(logp))) and bool(jnp.all(jnp.isfinite(h)))
        assert jnp.allclose(logp, ref_logp, atol=2e-2, rtol=2e-2), \
            float(jnp.max(jnp.abs(logp - ref_logp)))
        assert jnp.allclose(h, ref_h, atol=2e-2, rtol=2e-2), \
            float(jnp.max(jnp.abs(h - ref_h)))

    # Small graph: 16 nodes, single src step.
    run_case(k_x1, k_a1, 16, 0.3)
    # Larger graph: n_pad=256 with 128-tiles -> 2x2 (dst, src) grid, exercising
    # the online softmax across multiple src tiles and the parallel dst axis.
    run_case(k_x2, k_a2, 192, 0.05)

    print("KERNEL_OK")
</pallas_src>

<mosaic_0001>
module attributes {stable_mosaic.version = 11 : i64} {
  func.func @kernel(%arg0: i32, %arg1: memref<16x8xf32, #tpu.memory_space<vmem>>, %arg2: memref<8x32xbf16, #tpu.memory_space<vmem>>, %arg3: memref<2x32xbf16, #tpu.memory_space<vmem>>, %arg4: memref<32x2xbf16, #tpu.memory_space<vmem>>, %arg5: memref<16x32xbf16, #tpu.memory_space<vmem>>, %arg6: memref<2x16xf32, #tpu.memory_space<vmem>>, %arg7: memref<16x2xf32, #tpu.memory_space<vmem>>) attributes {dimension_semantics = [#tpu.dimension_semantics<parallel>], iteration_bounds = array<i64: 1>, scalar_prefetch = 0 : i64, scratch_operands = 0 : i64, tpu.core_type = #tpu.core_type<tc>, window_params = [{transform_indices = @transform_0, window_bounds = array<i64: 16, 8>}, {pipeline_mode = #tpu.pipeline_mode<synchronous>, transform_indices = @transform_1, window_bounds = array<i64: 8, 32>}, {pipeline_mode = #tpu.pipeline_mode<synchronous>, transform_indices = @transform_2, window_bounds = array<i64: 2, 32>}, {pipeline_mode = #tpu.pipeline_mode<synchronous>, transform_indices = @transform_3, window_bounds = array<i64: 32, 2>}, {transform_indices = @transform_4, window_bounds = array<i64: 16, 32>}, {transform_indices = @transform_5, window_bounds = array<i64: 2, 16>}, {transform_indices = @transform_6, window_bounds = array<i64: 16, 2>}]} {
    %c0 = arith.constant 0 : index
    %c0_0 = arith.constant 0 : index
    %0 = vector.load %arg1[%c0, %c0_0] : memref<16x8xf32, #tpu.memory_space<vmem>>, vector<16x8xf32>
    %1 = arith.truncf %0 : vector<16x8xf32> to vector<16x8xbf16>
    %c0_1 = arith.constant 0 : index
    %c0_2 = arith.constant 0 : index
    %2 = vector.load %arg2[%c0_1, %c0_2] : memref<8x32xbf16, #tpu.memory_space<vmem>>, vector<8x32xbf16>
    %cst = arith.constant dense<0.000000e+00> : vector<16x32xf32>
    %3 = tpu.matmul %1, %2, %cst {dimension_numbers = #tpu.dot_dimension_numbers<[1], [0], [0], [1], [0, 0, 1, 1], [], []>} : vector<16x8xbf16>, vector<8x32xbf16>, vector<16x32xf32> -> vector<16x32xf32>
    %4 = arith.truncf %3 : vector<16x32xf32> to vector<16x32xbf16>
    %c0_3 = arith.constant 0 : index
    %c0_4 = arith.constant 0 : index
    %5 = vector.load %arg5[%c0_3, %c0_4] : memref<16x32xbf16, #tpu.memory_space<vmem>>, vector<16x32xbf16>
    tpu.vector_store %arg5[%c0_3, %c0_4], %4 {strides = array<i32>} : memref<16x32xbf16, #tpu.memory_space<vmem>>, vector<16x32xbf16>,
    %c0_5 = arith.constant 0 : index
    %c0_6 = arith.constant 0 : index
    %6 = vector.load %arg4[%c0_5, %c0_6] : memref<32x2xbf16, #tpu.memory_space<vmem>>, vector<32x2xbf16>
    %cst_7 = arith.constant dense<0.000000e+00> : vector<16x2xf32>
    %7 = tpu.matmul %4, %6, %cst_7 {dimension_numbers = #tpu.dot_dimension_numbers<[1], [0], [0], [1], [0, 0, 1, 1], [], []>} : vector<16x32xbf16>, vector<32x2xbf16>, vector<16x2xf32> -> vector<16x2xf32>
    %c0_8 = arith.constant 0 : index
    %c0_9 = arith.constant 0 : index
    %8 = vector.load %arg7[%c0_8, %c0_9] : memref<16x2xf32, #tpu.memory_space<vmem>>, vector<16x2xf32>
    tpu.vector_store %arg7[%c0_8, %c0_9], %7 {strides = array<i32>} : memref<16x2xf32, #tpu.memory_space<vmem>>, vector<16x2xf32>,
    %c0_10 = arith.constant 0 : index
    %c0_11 = arith.constant 0 : index
    %9 = vector.load %arg3[%c0_10, %c0_11] : memref<2x32xbf16, #tpu.memory_space<vmem>>, vector<2x32xbf16>
    %cst_12 = arith.constant dense<0.000000e+00> : vector<2x16xf32>
    %10 = tpu.matmul %9, %4, %cst_12 {dimension_numbers = #tpu.dot_dimension_numbers<[1], [1], [0], [0], [0, 0, 1, 0], [], []>} : vector<2x32xbf16>, vector<16x32xbf16>, vector<2x16xf32> -> vector<2x16xf32>
    %c0_13 = arith.constant 0 : index
    %c0_14 = arith.constant 0 : index
    %11 = vector.load %arg6[%c0_13, %c0_14] : memref<2x16xf32, #tpu.memory_space<vmem>>, vector<2x16xf32>
    tpu.vector_store %arg6[%c0_13, %c0_14], %10 {strides = array<i32>} : memref<2x16xf32, #tpu.memory_space<vmem>>, vector<2x16xf32>,
    return
  }
  func.func @transform_0(%arg0: i32) -> (i32, i32) {
    %c0_i32 = arith.constant 0 : i32
    %c0_i32_0 = arith.constant 0 : i32
    return %arg0, %c0_i32 : i32, i32
  }
  func.func @transform_1(%arg0: i32) -> (i32, i32) {
    %c0_i32 = arith.constant 0 : i32
    %c0_i32_0 = arith.constant 0 : i32
    %c0_i32_1 = arith.constant 0 : i32
    return %c0_i32, %c0_i32_0 : i32, i32
  }
  func.func @transform_2(%arg0: i32) -> (i32, i32) {
    %c0_i32 = arith.constant 0 : i32
    %c0_i32_0 = arith.constant 0 : i32
    %c0_i32_1 = arith.constant 0 : i32
    return %c0_i32, %c0_i32_0 : i32, i32
  }
  func.func @transform_3(%arg0: i32) -> (i32, i32) {
    %c0_i32 = arith.constant 0 : i32
    %c0_i32_0 = arith.constant 0 : i32
    %c0_i32_1 = arith.constant 0 : i32
    return %c0_i32, %c0_i32_0 : i32, i32
  }
  func.func @transform_4(%arg0: i32) -> (i32, i32) {
    %c0_i32 = arith.constant 0 : i32
    %c0_i32_0 = arith.constant 0 : i32
    return %arg0, %c0_i32 : i32, i32
  }
  func.func @transform_5(%arg0: i32) -> (i32, i32) {
    %c0_i32 = arith.constant 0 : i32
    %c0_i32_0 = arith.constant 0 : i32
    return %c0_i32, %arg0 : i32, i32
  }
  func.func @transform_6(%arg0: i32) -> (i32, i32) {
    %c0_i32 = arith.constant 0 : i32
    %c0_i32_0 = arith.constant 0 : i32
    return %arg0, %c0_i32 : i32, i32
  }
}

</mosaic_0001>

<llo_original>
// kernel: tpu_custom_call.1
$region0: #{tpu_custom_call.1}
  #allocation0 [shape = 'u32[]', space=smem, size = 0x4, offset = 0x4, fixed_abs, tag = 'smem constant byte address 0x4 - core index']
  #allocation1 [shape = 'u32[72,128]{1,0:T(1,128)}', space=vmem, size = 0x9000, scoped, tag = 'internal scratch']
  %s0 = inlined_call_operand.vmem [shape: f32[16,8], index: 0, kind: input, shape index: {}]
  %s1 = inlined_call_operand.vmem [shape: bf16[8,32], index: 1, kind: input, shape index: {}]
  %s2 = inlined_call_operand.vmem [shape: bf16[2,32], index: 2, kind: input, shape index: {}]
  %s3 = inlined_call_operand.vmem [shape: bf16[32,2], index: 3, kind: input, shape index: {}]
  %s4 = inlined_call_operand.hbm [shape: bf16[16,32], index: 4, kind: output, shape index: {0}]
  %s5 = inlined_call_operand.hbm [shape: f32[2,16], index: 5, kind: output, shape index: {1}]
  %s6 = inlined_call_operand.vmem [shape: f32[16,2], index: 6, kind: output, shape index: {2}]
  %7 = xla_tuple %s4, %s5, %s6
  %s8 = sld [smem:[#allocation0]]
  $region42: #{tpu_custom_call.1} parent=0
    _
  %s10 = ssub.s32 1, %s8
  %s11 = scalar_select 0, %s10, %s8
  $region1: #{tpu_custom_call.1} parent=0
    #allocation2 [shape = 'u8[4096]{0}', space=vmem, size = 0x1000, scoped, tag = 'output window, operand 0, single buffered']
    #allocation3 [shape = 's32[1]{0}', space=sflag, size = 0x4, scoped, tag = 'scoped memory for tpu_custom_call.1']
    #allocation4 [shape = 'u8[1024]{0}', space=vmem, size = 0x400, scoped, tag = 'output window, operand 1, single buffered']
    #allocation5 [shape = 's32[1]{0}', space=sflag, size = 0x4, scoped, tag = 'scoped memory for tpu_custom_call.1']
    %12 = vsyncpa [#allocation3], 0
    %13 = vsyncpa [#allocation5], 0
    // Predicated region
    $region2: #{tpu_custom_call.1} parent=1 // pred_check
      _
    $region3: #{tpu_custom_call.1} parent=1 // pred_check_branch
      %15 = sbr.rel (0) target = $region5
    $region4: #{tpu_custom_call.1} parent=1 // pred_region
      _
    $region5: #{tpu_custom_call.1} parent=1 // pred_fallthru
      _
    // Predicated region
    $region6: #{tpu_custom_call.1} parent=1 // pred_check
      _
    $region7: #{tpu_custom_call.1} parent=1 // pred_check_branch
      %17 = sbr.rel (0) target = $region9
    $region8: #{tpu_custom_call.1} parent=1 // pred_region
      _
    $region9: #{tpu_custom_call.1} parent=1 // pred_fallthru
      _
    // Predicated region
    $region10: #{tpu_custom_call.1} parent=1 // pred_check
      _
    $region11: #{tpu_custom_call.1} parent=1 // pred_check_branch
      %19 = sbr.rel (0) target = $region13
    $region12: #{tpu_custom_call.1} parent=1 // pred_region
      _
    $region13: #{tpu_custom_call.1} parent=1 // pred_fallthru
      _
    // Predicated region
    $region14: #{tpu_custom_call.1} parent=1 // pred_check
      _
    $region15: #{tpu_custom_call.1} parent=1 // pred_check_branch
      %21 = sbr.rel (0) target = $region17
    $region16: #{tpu_custom_call.1} parent=1 // pred_region
      _
    $region17: #{tpu_custom_call.1} parent=1 // pred_fallthru
      _
    %v23 = vld [vmem:[%s0] sm:$0xff]
    %v24 = vld [vmem:[%s0 + $0x8] sm:$0xff]
    %v25 = vpack.c.bf16 %v24, %v23
    %v26 = vld [vmem:[%s1] sm:$0xf]
    %vm27 = vcmask 64512
    %v29 = vsel %vm27, %v25, 0
    %vm31 = vcmask 1043456
    %v33 = vsel %vm31, %v26, 0
    %35 = vmatpush.bf16.msra.mxu0 0
    %36 = vmatpush.bf16.msra.mxu0 0
    %37 = vmatpush.bf16.msra.mxu0 0
    %38 = vmatpush.bf16.msra.mxu0 0
    %39 = vmatpush.bf16.msra.mxu0 0
    %40 = vmatpush.bf16.msra.mxu0 0
    %41 = vmatpush.bf16.msra.mxu0 0
    %42 = vmatpush.bf16.msra.mxu0 %v33
    %43 = vmatmul.bf16.gmra.mxu0 %v29
    %v44 = vpop.f32.mrf.mxu0
    %v45 = vadd.f32 0.0, %v44
    %v46 = vpop.f32.mrf.mxu0
    %v47 = vadd.f32 0.0, %v46
    %48 = vdwg.mxu0
    %v49 = vpack.c.bf16 %v45, %v45
    %v50 = vpack.c.bf16 %v47, %v47
    %vm51 = vcmask 257024
    %52 = vst.msk [vmem:[#allocation2] sm:$0xf] %vm51, %v49
    %53 = vst.msk [vmem:[#allocation2 + $0x4] sm:$0xf] %vm51, %v50
    %v54 = vld [vmem:[%s3] sm:$0xf]
    %v55 = vld [vmem:[%s3 + $0x4] sm:$0xf]
    %v56 = vld [vmem:[%s3 + $0x8] sm:$0xf]
    %v57 = vld [vmem:[%s3 + $0xc] sm:$0xf]
    %v60 = vunpack.c.l.b16 %v49
    %v61 = vunpack.c.l.b16 %v50
    %v62 = vpack.c.b16 %v61, %v60
    %v67 = vunpack.c.l.b16 %v54
    %v68 = vunpack.c.l.b16 %v55
    %v69 = vunpack.c.l.b16 %v56
    %v70 = vunpack.c.l.b16 %v57
    %v71 = vpack.c.b16 %v68, %v67
    %v72 = vpack.c.b16 %v70, %v69
    %vm75 = vcmask 261120
    %v77 = vsel %vm75, %v62, 0
    %79 = vmatpush.bf16.msra.mxu0 0
    %80 = vmatpush.bf16.msra.mxu0 0
    %81 = vmatpush.bf16.msra.mxu0 0
    %82 = vmatpush.bf16.msra.mxu0 0
    %83 = vmatpush.bf16.msra.mxu0 0
    %84 = vmatpush.bf16.msra.mxu0 0
    %85 = vmatpush.bf16.msra.mxu0 %v72
    %86 = vmatpush.bf16.msra.mxu0 %v71
    %87 = vmatmul.bf16.gmra.mxu0 %v77
    %v88 = vpop.f32.mrf.mxu0
    %v89 = vadd.f32 0.0, %v88
    %v90 = vpop.f32.mrf.mxu0
    %v91 = vadd.f32 0.0, %v90
    %92 = vdwg.mxu0
    %vm93 = vcmask 15360
    %94 = vst.msk [vmem:[%s6] sm:$0xff] %vm93, %v89
    %95 = vst.msk [vmem:[%s6 + $0x8] sm:$0xff] %vm93, %v91
    %v96 = vld [vmem:[%s2] sm:$0x1]
    %v98 = vsel %vm75, %v96, 0
    %100 = vmatpush.bf16.xpose.msra.mxu0 0
    %101 = vmatpush.bf16.xpose.msra.mxu0 0
    %102 = vmatpush.bf16.xpose.msra.mxu0 0
    %103 = vmatpush.bf16.xpose.msra.mxu0 0
    %104 = vmatpush.bf16.xpose.msra.mxu0 0
    %105 = vmatpush.bf16.xpose.msra.mxu0 0
    %106 = vmatpush.bf16.xpose.msra.mxu0 0
    %107 = vmatpush.bf16.xpose.msra.mxu0 %v77
    %108 = vmatmul.bf16.gmra.mxu0 %v98
    %v109 = vpop.f32.mrf.mxu0
    %v110 = vadd.f32 0.0, %v109
    %v111 = vpop.f32.mrf.mxu0
    %112 = vdwg.mxu0
    %vm113 = vcmask 123904
    %114 = vst.msk [vmem:[#allocation4] sm:$0x3] %vm113, %v110
    // Predicated region
    $region18: #{tpu_custom_call.1} parent=1 // pred_check
      _
    $region19: #{tpu_custom_call.1} parent=1 // pred_check_branch
      %116 = sbr.rel (0) target = $region21
    $region20: #{tpu_custom_call.1} parent=1 // pred_region
      %118 = vsyncadd [#allocation3], 0
      %s119 = sshll.u32 [#allocation2], 4
      %s120 = int_to_ptr.vmem [resolvable:$true] %s119
      %s121 = sshll.u32 %s4, 4
      %s122 = int_to_ptr.hbm [resolvable:$true] %s121
      %127 = dma.vmem_to_hbm [thread:$0]  %s120, 128, %s122, [#allocation3], 64, 64, 4
    $region21: #{tpu_custom_call.1} parent=1 // pred_fallthru
      _
    // Predicated region
    $region22: #{tpu_custom_call.1} parent=1 // pred_check
      _
    $region23: #{tpu_custom_call.1} parent=1 // pred_check_branch
      %129 = sbr.rel (0) target = $region25
    $region24: #{tpu_custom_call.1} parent=1 // pred_region
      %131 = vsyncadd [#allocation5], 0
      %s133 = sshll.u32 [#allocation4], 4
      %s134 = int_to_ptr.vmem [resolvable:$true] %s133
      %s135 = sshll.u32 %s5, 4
      %s136 = int_to_ptr.hbm [resolvable:$true] %s135
      %138 = dma.vmem_to_hbm [thread:$0]  %s134, 32, %s136, [#allocation5]
    $region25: #{tpu_custom_call.1} parent=1 // pred_fallthru
      _
    // Predicated region
    $region26: #{tpu_custom_call.1} parent=1 // pred_check
      _
    $region27: #{tpu_custom_call.1} parent=1 // pred_check_branch
      %140 = sbr.rel (0) target = $region29
    $region28: #{tpu_custom_call.1} parent=1 // pred_region
      _
    $region29: #{tpu_custom_call.1} parent=1 // pred_fallthru
      _
    // Predicated region
    $region30: #{tpu_custom_call.1} parent=1 // pred_check
      _
    $region31: #{tpu_custom_call.1} parent=1 // pred_check_branch
      %142 = sbr.rel (0) target = $region33
    $region32: #{tpu_custom_call.1} parent=1 // pred_region
      %144 = dma.done [#allocation3], 128
    $region33: #{tpu_custom_call.1} parent=1 // pred_fallthru
      _
    // Predicated region
    $region34: #{tpu_custom_call.1} parent=1 // pred_check
      _
    $region35: #{tpu_custom_call.1} parent=1 // pred_check_branch
      %146 = sbr.rel (0) target = $region37
    $region36: #{tpu_custom_call.1} parent=1 // pred_region
      %148 = dma.done [#allocation5], 32
    $region37: #{tpu_custom_call.1} parent=1 // pred_fallthru
      _
    // Predicated region
    $region38: #{tpu_custom_call.1} parent=1 // pred_check
      _
    $region39: #{tpu_custom_call.1} parent=1 // pred_check_branch
      %150 = sbr.rel (0) target = $region41
    $region40: #{tpu_custom_call.1} parent=1 // pred_region
      _
    $region41: #{tpu_custom_call.1} parent=1 // pred_fallthru
      _
    %151 = vsyncpa [#allocation3], 1
    %152 = vsyncpa [#allocation5], 1

</llo_original>
